<compile_context>
chip_gen: v7x
topology: tpu7x:2x2x1
jax: 0.10.0
libtpu: 0.0.40
codegen_flags: <defaults>
</compile_context>

<pallas_src>
import jax
import jax.numpy as jnp
from jax.experimental import pallas as pl
from jax.experimental.pallas import tpu as pltpu

REZERO_INIT = 1e-3  # deterministic synthetic init for the alpha parameter

_FAST_PATH_BYTES = 1 << 20  # below ~1 MiB a fused XLA elementwise op wins


def _residual_kernel(alpha_ref, out_ref, res_ref, o_ref):
    # alpha_ref: SMEM scalar (shape (1,)); out_ref/res_ref/o_ref: VMEM tiles.
    # Cast alpha once to the operand dtype so bf16 inputs stay bf16 on the VPU.
    alpha = alpha_ref[0].astype(out_ref.dtype)
    o_ref[...] = (alpha * out_ref[...] + res_ref[...]).astype(o_ref.dtype)


def _sublane_multiple(dtype) -> int:
    # Second-to-last block dim granularity: f32 -> 8, bf16/f16 -> 16, int8 -> 32.
    itemsize = jnp.dtype(dtype).itemsize
    return {4: 8, 2: 16, 1: 32}.get(itemsize, 8)


def _block_budget_bytes() -> int:
    # 8 MiB blocks on 128-MiB-VMEM generations (v5e/v6e); 4 MiB on v7x
    # (64 MiB VMEM, shared with compiler scratch) or if the query fails.
    try:
        info = pltpu.get_tpu_info()
        vmem = getattr(info, "vmem_capacity_bytes", None)
        if vmem is not None and vmem >= (96 << 20):
            return 8 << 20
    except Exception:
        pass
    return 4 << 20


def residual(out: jax.Array, res: jax.Array, alpha: jax.Array,
             *, force_pallas: bool = False, donate_out: bool = False) -> jax.Array:
    """alpha * out + res, computed in a Pallas TPU kernel."""
    if out.shape != res.shape:
        raise Exception("rezero - shapes do not match -- likely error")

    orig_shape = out.shape
    total = out.size
    dtype = out.dtype
    itemsize = jnp.dtype(dtype).itemsize
    sublane = _sublane_multiple(dtype)

    # Small-tensor fast path: pallas_call fixed cost dominates below ~1 MiB.
    if not force_pallas and total * itemsize < _FAST_PATH_BYTES:
        return (alpha[0].astype(dtype) * out + res).astype(dtype)

    # Lane-dense layout: largest 128-multiple that exactly divides the element
    # count (and leaves at least `sublane` rows).  Exact division means no pad
    # and no output slice -> zero extra HBM traffic in the wrapper.
    lane = None
    for cand in (4096, 2048, 1024, 512, 256, 128):
        if total % cand == 0 and total // cand >= sublane:
            lane = cand
            break
    if lane is None:
        lane = 128  # tiny tensor or total not a multiple of 128 (rare)

    padded_total = pl.cdiv(total, lane) * lane  # == total unless total % 128 != 0
    rows = padded_total // lane

    # Row tile: largest multiple of the dtype sublane granularity within the
    # per-block VMEM budget (3 arrays x 2 double-buffers fit comfortably).
    budget = _block_budget_bytes()
    tile_r = max(sublane, (budget // (lane * itemsize)) // sublane * sublane)

    # Prefer >= 4 grid steps when rows allow it: balances v7x's 2 TensorCores
    # (even, multi-step work per core) and gives v5e/v6e pipeline steady state.
    MIN_STEPS = 4
    if rows >= MIN_STEPS * sublane:
        cap = max(sublane, (rows // MIN_STEPS) // sublane * sublane)
        tile_r = min(tile_r, cap)

    if rows <= sublane:
        tile_r = rows  # single block; block dim == full array dim (allowed)
    else:
        tile_r = min(tile_r, (rows // sublane) * sublane)

    # Reshape is a bitcast for contiguous inputs; pad only the rare ragged tail.
    if padded_total == total:
        out2 = out.reshape(rows, lane)
        res2 = res.reshape(rows, lane)
    else:
        pad = padded_total - total
        out2 = jnp.pad(out.reshape(-1), (0, pad)).reshape(rows, lane)
        res2 = jnp.pad(res.reshape(-1), (0, pad)).reshape(rows, lane)

    grid = (pl.cdiv(rows, tile_r),)  # last block may be partial (masked stores)
    working_set = 3 * 2 * tile_r * lane * itemsize  # 3 arrays x double buffer
    vmem_limit = min(128 << 20, max(32 << 20, working_set + (8 << 20)))

    aliases = {1: 0} if donate_out else {}

    y2 = pl.pallas_call(
        _residual_kernel,
        out_shape=jax.ShapeDtypeStruct((rows, lane), dtype),
        grid_spec=pl.GridSpec(
            grid=grid,
            in_specs=[
                pl.BlockSpec(memory_space=pltpu.MemorySpace.SMEM),  # alpha scalar
                pl.BlockSpec((tile_r, lane), lambda i: (i, 0)),
                pl.BlockSpec((tile_r, lane), lambda i: (i, 0)),
            ],
            out_specs=pl.BlockSpec((tile_r, lane), lambda i: (i, 0)),
        ),
        input_output_aliases=aliases,
        compiler_params=pltpu.CompilerParams(
            dimension_semantics=("parallel",),
            vmem_limit_bytes=vmem_limit,
        ),
    )(alpha, out2, res2)

    if padded_total == total:
        return y2.reshape(orig_shape)
    return y2.reshape(-1)[:total].reshape(orig_shape)


if __name__ == "__main__":
    key = jax.random.PRNGKey(0)
    k1, k2 = jax.random.split(key)

    # NCHW, small shapes: batch=2, channels=4, spatial=16x16
    out = jax.random.normal(k1, (2, 4, 16, 16), dtype=jnp.float32)
    res = jax.random.normal(k2, (2, 4, 16, 16), dtype=jnp.float32)

    # alpha parameter: torch.zeros(1) + REZERO_INIT
    alpha = jnp.zeros((1,), dtype=jnp.float32) + REZERO_INIT

    # Exercise the Pallas kernel (force past the small-tensor XLA fast path).
    y = residual(out, res, alpha, force_pallas=True)
    y = jax.block_until_ready(y)

    # Reference check (plain JAX)
    y_ref = alpha[0] * out + res
    assert y.shape == out.shape
    assert jnp.allclose(y, y_ref, atol=1e-6, rtol=1e-6), "mismatch vs reference"

    # Also sanity-check the small-tensor fast path.
    y_fast = jax.block_until_ready(residual(out, res, alpha))
    assert jnp.allclose(y_fast, y_ref, atol=1e-6, rtol=1e-6), "fast path mismatch"

    print("KERNEL_OK")
</pallas_src>

<mosaic_0001>
module attributes {stable_mosaic.version = 11 : i64} {
  func.func @_residual_kernel(%arg0: i32, %arg1: memref<1xf32, #tpu.memory_space<smem>>, %arg2: memref<8x256xf32, #tpu.memory_space<vmem>>, %arg3: memref<8x256xf32, #tpu.memory_space<vmem>>, %arg4: memref<8x256xf32, #tpu.memory_space<vmem>>) attributes {dimension_semantics = [#tpu.dimension_semantics<parallel>], iteration_bounds = array<i64: 1>, scalar_prefetch = 0 : i64, scratch_operands = 0 : i64, tpu.core_type = #tpu.core_type<tc>, window_params = [{transform_indices = @transform_0, window_bounds = array<i64: 1>}, {transform_indices = @transform_1, window_bounds = array<i64: 8, 256>}, {transform_indices = @transform_2, window_bounds = array<i64: 8, 256>}, {transform_indices = @transform_3, window_bounds = array<i64: 8, 256>}]} {
    %c0 = arith.constant 0 : index
    %0 = memref.load %arg1[%c0] : memref<1xf32, #tpu.memory_space<smem>>
    %c0_0 = arith.constant 0 : index
    %c0_1 = arith.constant 0 : index
    %1 = vector.load %arg2[%c0_0, %c0_1] : memref<8x256xf32, #tpu.memory_space<vmem>>, vector<8x256xf32>
    %2 = vector.broadcast %0 : f32 to vector<8x256xf32>
    %3 = arith.mulf %2, %1 : vector<8x256xf32>
    %c0_2 = arith.constant 0 : index
    %c0_3 = arith.constant 0 : index
    %4 = vector.load %arg3[%c0_2, %c0_3] : memref<8x256xf32, #tpu.memory_space<vmem>>, vector<8x256xf32>
    %5 = arith.addf %3, %4 : vector<8x256xf32>
    %c0_4 = arith.constant 0 : index
    %c0_5 = arith.constant 0 : index
    %6 = vector.load %arg4[%c0_4, %c0_5] : memref<8x256xf32, #tpu.memory_space<vmem>>, vector<8x256xf32>
    tpu.vector_store %arg4[%c0_4, %c0_5], %5 {strides = array<i32>} : memref<8x256xf32, #tpu.memory_space<vmem>>, vector<8x256xf32>,
    return
  }
  func.func @transform_0(%arg0: i32) -> i32 {
    %c0_i32 = arith.constant 0 : i32
    %c0_i32_0 = arith.constant 0 : i32
    return %c0_i32 : i32
  }
  func.func @transform_1(%arg0: i32) -> (i32, i32) {
    %c0_i32 = arith.constant 0 : i32
    %c0_i32_0 = arith.constant 0 : i32
    return %arg0, %c0_i32 : i32, i32
  }
  func.func @transform_2(%arg0: i32) -> (i32, i32) {
    %c0_i32 = arith.constant 0 : i32
    %c0_i32_0 = arith.constant 0 : i32
    return %arg0, %c0_i32 : i32, i32
  }
  func.func @transform_3(%arg0: i32) -> (i32, i32) {
    %c0_i32 = arith.constant 0 : i32
    %c0_i32_0 = arith.constant 0 : i32
    return %arg0, %c0_i32 : i32, i32
  }
}

</mosaic_0001>

<llo_original>
// kernel: tpu_custom_call.1
$region0: #{tpu_custom_call.1}
  #allocation0 [shape = 'u32[]', space=smem, size = 0x4, offset = 0x4, fixed_abs, tag = 'smem constant byte address 0x4 - core index']
  #allocation1 [shape = 'u32[144,128]{1,0:T(1,128)}', space=vmem, size = 0x12000, scoped, tag = 'internal scratch']
  #allocation2 [shape = 'f32[1]{0:T(128)S(6)}', space=smem, size = 0x200, scoped, tag = 'scoped memory for tpu_custom_call.1']
  %s0 = inlined_call_operand.<no memory space> [shape: f32[1], index: 0, kind: input, shape index: {}]
  %s1 = inlined_call_operand.hbm [shape: f32[8,256], index: 1, kind: input, shape index: {}]
  %s2 = inlined_call_operand.hbm [shape: f32[8,256], index: 2, kind: input, shape index: {}]
  %s3 = inlined_call_operand.hbm [shape: f32[8,256], index: 3, kind: output, shape index: {}]
  %s4 = sld [smem:[#allocation0]]
  $region30: #{tpu_custom_call.1} parent=0
    _
  %s6 = ssub.s32 1, %s4
  %s7 = scalar_select 0, %s6, %s4
  %8 = sst [smem:[#allocation2]] %s0
  $region1: #{tpu_custom_call.1} parent=0
    #allocation3 [shape = 'u8[8192]{0}', space=vmem, size = 0x2000, scoped, tag = 'input window, operand 1, single buffered']
    #allocation4 [shape = 's32[1]{0}', space=sflag, size = 0x4, scoped, tag = 'scoped memory for tpu_custom_call.1']
    #allocation5 [shape = 's32[1]{0}', space=sflag, size = 0x4, scoped, tag = 'scoped memory for tpu_custom_call.1']
    #allocation6 [shape = 'u8[8192]{0}', space=vmem, size = 0x2000, scoped, tag = 'input window, operand 2, single buffered']
    #allocation7 [shape = 's32[1]{0}', space=sflag, size = 0x4, scoped, tag = 'scoped memory for tpu_custom_call.1']
    #allocation8 [shape = 'u8[8192]{0}', space=vmem, size = 0x2000, scoped, tag = 'output window, operand 0, single buffered']
    %9 = vsyncpa [#allocation4], 0
    %10 = vsyncpa [#allocation7], 0
    %11 = vsyncpa [#allocation5], 0
    // Predicated region
    $region2: #{tpu_custom_call.1} parent=1 // pred_check
      _
    $region3: #{tpu_custom_call.1} parent=1 // pred_check_branch
      %13 = sbr.rel (0) target = $region5
    $region4: #{tpu_custom_call.1} parent=1 // pred_region
      _
    $region5: #{tpu_custom_call.1} parent=1 // pred_fallthru
      _
    // Predicated region
    $region6: #{tpu_custom_call.1} parent=1 // pred_check
      _
    $region7: #{tpu_custom_call.1} parent=1 // pred_check_branch
      %15 = sbr.rel (0) target = $region9
    $region8: #{tpu_custom_call.1} parent=1 // pred_region
      %s17 = ssub.s32 256, 256
      %18 = vsyncadd [#allocation4], %s17
      %s20 = sshll.u32 [#allocation3], 4
      %s21 = int_to_ptr.vmem [resolvable:$true] %s20
      %23 = dma.hbm_to_vmem [thread:$0]  %s1, 256, %s21, [#allocation4]
    $region9: #{tpu_custom_call.1} parent=1 // pred_fallthru
      _
    // Predicated region
    $region10: #{tpu_custom_call.1} parent=1 // pred_check
      _
    $region11: #{tpu_custom_call.1} parent=1 // pred_check_branch
      %25 = sbr.rel (0) target = $region13
    $region12: #{tpu_custom_call.1} parent=1 // pred_region
      %s27 = ssub.s32 256, 256
      %28 = vsyncadd [#allocation7], %s27
      %s30 = sshll.u32 [#allocation6], 4
      %s31 = int_to_ptr.vmem [resolvable:$true] %s30
      %33 = dma.hbm_to_vmem [thread:$0]  %s2, 256, %s31, [#allocation7]
    $region13: #{tpu_custom_call.1} parent=1 // pred_fallthru
      _
    // Predicated region
    $region14: #{tpu_custom_call.1} parent=1 // pred_check
      _
    $region15: #{tpu_custom_call.1} parent=1 // pred_check_branch
      %35 = sbr.rel (0) target = $region17
    $region16: #{tpu_custom_call.1} parent=1 // pred_region
      %36 = dma.done [#allocation4], 256
    $region17: #{tpu_custom_call.1} parent=1 // pred_fallthru
      _
    // Predicated region
    $region18: #{tpu_custom_call.1} parent=1 // pred_check
      _
    $region19: #{tpu_custom_call.1} parent=1 // pred_check_branch
      %38 = sbr.rel (0) target = $region21
    $region20: #{tpu_custom_call.1} parent=1 // pred_region
      %39 = dma.done [#allocation7], 256
    $region21: #{tpu_custom_call.1} parent=1 // pred_fallthru
      _
    %s40 = sld [smem:[#allocation2]]
    %v41 = vld [vmem:[#allocation3] sm:$0xff]
    %v42 = vld [vmem:[#allocation3 + $0x8] sm:$0xff]
    %v43 = vstv %s40
    %v44 = vmul.f32 %v43, %v41
    %v45 = vmul.f32 %v43, %v42
    %v46 = vld [vmem:[#allocation6] sm:$0xff]
    %v47 = vld [vmem:[#allocation6 + $0x8] sm:$0xff]
    %v48 = vadd.f32 %v44, %v46
    %v49 = vadd.f32 %v45, %v47
    %50 = vst [vmem:[#allocation8] sm:$0xff] %v48
    %51 = vst [vmem:[#allocation8 + $0x8] sm:$0xff] %v49
    // Predicated region
    $region22: #{tpu_custom_call.1} parent=1 // pred_check
      _
    $region23: #{tpu_custom_call.1} parent=1 // pred_check_branch
      %53 = sbr.rel (0) target = $region25
    $region24: #{tpu_custom_call.1} parent=1 // pred_region
      %s55 = ssub.s32 256, 256
      %56 = vsyncadd [#allocation5], %s55
      %s58 = sshll.u32 [#allocation8], 4
      %s59 = int_to_ptr.vmem [resolvable:$true] %s58
      %61 = dma.vmem_to_hbm [thread:$0]  %s59, 256, %s3, [#allocation5]
    $region25: #{tpu_custom_call.1} parent=1 // pred_fallthru
      _
    // Predicated region
    $region26: #{tpu_custom_call.1} parent=1 // pred_check
      _
    $region27: #{tpu_custom_call.1} parent=1 // pred_check_branch
      %63 = sbr.rel (0) target = $region29
    $region28: #{tpu_custom_call.1} parent=1 // pred_region
      %64 = dma.done [#allocation5], 256
    $region29: #{tpu_custom_call.1} parent=1 // pred_fallthru
      _
    %65 = vsyncpa [#allocation4], 1
    %66 = vsyncpa [#allocation7], 1
    %67 = vsyncpa [#allocation5], 1

</llo_original>
